<compile_context>
chip_gen: v7x
topology: tpu7x:2x2x1
jax: 0.10.0
libtpu: 0.0.40
codegen_flags: <defaults>
</compile_context>

<pallas_src>
import jax
import jax.numpy as jnp
from jax.experimental import pallas as pl
from jax.experimental.pallas import tpu as pltpu


_LANE = 128     # lane width: last dim of every block padded to a multiple of this
_SUBLANE = 8    # sublane: second-to-last dim of activation tiles


def _round_up(x, m):
    return ((x + m - 1) // m) * m


def _make_mlp_kernel(num_layers):
    """Fused MLP kernel.  Ref order: x, w0, b0, w1, b1, ..., w{L-1}, b{L-1}, out.

    Hidden layers use sigmoid (the module's default_hidden_activation); the final
    layer has no activation (regression / classification logits).
    """

    def kernel(x_ref, *refs):
        out_ref = refs[-1]
        params = refs[:-1]
        h = x_ref[...].astype(jnp.float32)
        for i in range(num_layers):
            w = params[2 * i][...]                  # bf16 (d_in_pad, d_out_pad)
            b = params[2 * i + 1][...]              # f32  (1, d_out_pad)
            # bf16 operands into the MXU, f32 accumulation; bias add in f32.
            h = jnp.dot(h.astype(jnp.bfloat16), w,
                        preferred_element_type=jnp.float32) + b
            if i != num_layers - 1:
                h = jax.nn.sigmoid(h)               # f32 on VPU/EUP (v5e-safe)
        out_ref[...] = h.astype(out_ref.dtype)

    return kernel


def feedforward_network(x, weights, biases, *, batch_tile=512):
    """Fused MLP forward pass as a single Pallas TPU kernel.

    x:       (B, input_dim) float32
    weights: list of (d_in, d_out) arrays (PyTorch nn.Linear weight, transposed)
    biases:  list of (d_out,) arrays
    returns: (B, output_dim) float32
    """
    num_layers = len(weights)
    assert len(biases) == num_layers and num_layers >= 1
    B, in_dim = x.shape
    out_dim = weights[-1].shape[1]

    # ---- lane-dense feature padding (multiples of 128) ----------------------
    dims = [in_dim] + [w.shape[1] for w in weights]
    dims_pad = [_round_up(d, _LANE) for d in dims]
    in_pad, out_pad = dims_pad[0], dims_pad[-1]

    # ---- batch tiling / padding (grid always divides exactly) ---------------
    batch_tile = max(
        _SUBLANE, _round_up(min(batch_tile, _round_up(B, _SUBLANE)), _SUBLANE))
    B_pad = _round_up(B, batch_tile)
    grid = (B_pad // batch_tile,)

    x_pad = jnp.pad(x.astype(jnp.float32),
                    ((0, B_pad - B), (0, in_pad - in_dim)))

    # ---- pack params: bf16 weights (MXU-native), f32 (1, d) biases ----------
    params = []
    param_specs = []
    for li, (w, b) in enumerate(zip(weights, biases)):
        d_in, d_out = dims_pad[li], dims_pad[li + 1]
        w_pad = jnp.pad(w.astype(jnp.bfloat16),
                        ((0, d_in - w.shape[0]), (0, d_out - w.shape[1])))
        b_pad = jnp.pad(b.astype(jnp.float32),
                        (0, d_out - b.shape[0])).reshape(1, d_out)
        params += [w_pad, b_pad]
        # Grid-invariant full blocks: kept resident / DMA'd once for the grid.
        param_specs += [
            pl.BlockSpec((d_in, d_out), lambda i: (0, 0)),
            pl.BlockSpec((1, d_out), lambda i: (0, 0)),
        ]

    in_specs = [pl.BlockSpec((batch_tile, in_pad), lambda i: (i, 0))] + param_specs
    out_specs = pl.BlockSpec((batch_tile, out_pad), lambda i: (i, 0))

    # ---- VMEM budget (v7x: 64 MiB physical / 32 MiB default scoped) ---------
    weight_bytes = sum(int(p.size) * p.dtype.itemsize for p in params)
    act_bytes = 4 * batch_tile * (2 * in_pad + 2 * out_pad + 2 * max(dims_pad))
    budget = 2 * weight_bytes + act_bytes           # x2: pipeline double-buffering
    vmem_limit = min(64 * 1024 * 1024, max(32 * 1024 * 1024, int(1.5 * budget)))

    # ---- cost estimate for the XLA scheduler ---------------------------------
    flops = 2 * B_pad * sum(dims_pad[i] * dims_pad[i + 1] for i in range(num_layers))
    transcendentals = B_pad * sum(dims_pad[1:-1])   # one exp per hidden unit
    bytes_accessed = int(x_pad.size) * 4 + weight_bytes + B_pad * out_pad * 4
    cost = pl.CostEstimate(flops=flops, transcendentals=transcendentals,
                           bytes_accessed=bytes_accessed)

    kernel = _make_mlp_kernel(num_layers)

    out_padded = pl.pallas_call(
        kernel,
        out_shape=jax.ShapeDtypeStruct((B_pad, out_pad), jnp.float32),
        grid_spec=pltpu.PrefetchScalarGridSpec(
            num_scalar_prefetch=0,
            grid=grid,
            in_specs=in_specs,
            out_specs=out_specs,
        ),
        compiler_params=pltpu.CompilerParams(
            dimension_semantics=("parallel",),      # batch axis -> megacore sharding
            vmem_limit_bytes=vmem_limit,
        ),
        cost_estimate=cost,
    )(x_pad, *params)

    return out_padded[:B, :out_dim]


def init_params(key, layer_dims):
    """PyTorch nn.Linear-style init: U(-1/sqrt(fan_in), 1/sqrt(fan_in))."""
    weights, biases = [], []
    for i in range(1, len(layer_dims)):
        d_in, d_out = layer_dims[i - 1], layer_dims[i]
        key, kw, kb = jax.random.split(key, 3)
        bound = 1.0 / jnp.sqrt(d_in)
        w = jax.random.uniform(kw, (d_in, d_out), jnp.float32, -bound, bound)
        b = jax.random.uniform(kb, (d_out,), jnp.float32, -bound, bound)
        weights.append(w)
        biases.append(b)
    return weights, biases


def reference_forward(x, weights, biases, *, emulate_bf16=True):
    """Pure-JAX reference mirroring the PyTorch module's forward.

    With emulate_bf16=True the matmul operands are rounded to bf16 (as the kernel
    feeds the MXU) while accumulation, bias add and sigmoid stay in f32.
    """
    h = x.astype(jnp.float32)
    n = len(weights)
    for i, (w, b) in enumerate(zip(weights, biases)):
        if emulate_bf16:
            hm = h.astype(jnp.bfloat16).astype(jnp.float32)
            wm = w.astype(jnp.bfloat16).astype(jnp.float32)
        else:
            hm, wm = h, w.astype(jnp.float32)
        h = hm @ wm + b.astype(jnp.float32)
        if i != n - 1:
            h = jax.nn.sigmoid(h)
    return h


if __name__ == "__main__":
    key = jax.random.PRNGKey(0)

    # --- Case 1: tiny deterministic example ---------------------------------
    #   input_dim=16, hidden_dims=[32, 32], output_dim=1 (regression), batch=16
    key, kx1 = jax.random.split(key)
    batch, input_dim, hidden_dims, output_dim = 16, 16, [32, 32], 1
    layer_dims = [input_dim] + hidden_dims + [output_dim]
    x1 = jax.random.normal(kx1, (batch, input_dim), jnp.float32)
    w1, b1 = init_params(key, layer_dims)

    out1 = jax.block_until_ready(feedforward_network(x1, w1, b1))
    ref1 = reference_forward(x1, w1, b1, emulate_bf16=True)
    assert out1.shape == (batch, output_dim)
    assert jnp.allclose(out1, ref1, atol=1e-3, rtol=1e-3)

    # --- Case 2: multi-tile grid + ragged batch (exercises padding path) -----
    key, kx2, kp2 = jax.random.split(key, 3)
    batch2, input_dim2, hidden_dims2, output_dim2 = 300, 24, [64, 48], 1
    layer_dims2 = [input_dim2] + hidden_dims2 + [output_dim2]
    x2 = jax.random.normal(kx2, (batch2, input_dim2), jnp.float32)
    w2, b2 = init_params(kp2, layer_dims2)

    out2 = jax.block_until_ready(
        feedforward_network(x2, w2, b2, batch_tile=128))
    ref2 = reference_forward(x2, w2, b2, emulate_bf16=True)
    assert out2.shape == (batch2, output_dim2)
    assert jnp.allclose(out2, ref2, atol=1e-3, rtol=1e-3)

    print("KERNEL_OK")
</pallas_src>

<mosaic_0001>
module attributes {stable_mosaic.version = 11 : i64} {
  func.func @kernel(%arg0: i32, %arg1: memref<16x128xf32, #tpu.memory_space<vmem>>, %arg2: memref<128x128xbf16, #tpu.memory_space<vmem>>, %arg3: memref<1x128xf32, #tpu.memory_space<vmem>>, %arg4: memref<128x128xbf16, #tpu.memory_space<vmem>>, %arg5: memref<1x128xf32, #tpu.memory_space<vmem>>, %arg6: memref<128x128xbf16, #tpu.memory_space<vmem>>, %arg7: memref<1x128xf32, #tpu.memory_space<vmem>>, %arg8: memref<16x128xf32, #tpu.memory_space<vmem>>) attributes {dimension_semantics = [#tpu.dimension_semantics<parallel>], iteration_bounds = array<i64: 1>, scalar_prefetch = 0 : i64, scratch_operands = 0 : i64, tpu.core_type = #tpu.core_type<tc>, window_params = [{transform_indices = @transform_0, window_bounds = array<i64: 16, 128>}, {pipeline_mode = #tpu.pipeline_mode<synchronous>, transform_indices = @transform_1, window_bounds = array<i64: 128, 128>}, {pipeline_mode = #tpu.pipeline_mode<synchronous>, transform_indices = @transform_2, window_bounds = array<i64: 1, 128>}, {pipeline_mode = #tpu.pipeline_mode<synchronous>, transform_indices = @transform_3, window_bounds = array<i64: 128, 128>}, {pipeline_mode = #tpu.pipeline_mode<synchronous>, transform_indices = @transform_4, window_bounds = array<i64: 1, 128>}, {pipeline_mode = #tpu.pipeline_mode<synchronous>, transform_indices = @transform_5, window_bounds = array<i64: 128, 128>}, {pipeline_mode = #tpu.pipeline_mode<synchronous>, transform_indices = @transform_6, window_bounds = array<i64: 1, 128>}, {transform_indices = @transform_7, window_bounds = array<i64: 16, 128>}]} {
    %c0 = arith.constant 0 : index
    %c0_0 = arith.constant 0 : index
    %0 = vector.load %arg1[%c0, %c0_0] : memref<16x128xf32, #tpu.memory_space<vmem>>, vector<16x128xf32>
    %c0_1 = arith.constant 0 : index
    %c0_2 = arith.constant 0 : index
    %1 = vector.load %arg2[%c0_1, %c0_2] : memref<128x128xbf16, #tpu.memory_space<vmem>>, vector<128x128xbf16>
    %c0_3 = arith.constant 0 : index
    %c0_4 = arith.constant 0 : index
    %2 = vector.load %arg3[%c0_3, %c0_4] : memref<1x128xf32, #tpu.memory_space<vmem>>, vector<1x128xf32>
    %3 = arith.truncf %0 : vector<16x128xf32> to vector<16x128xbf16>
    %cst = arith.constant dense<0.000000e+00> : vector<16x128xf32>
    %4 = tpu.matmul %3, %1, %cst {dimension_numbers = #tpu.dot_dimension_numbers<[1], [0], [0], [1], [0, 0, 1, 1], [], []>} : vector<16x128xbf16>, vector<128x128xbf16>, vector<16x128xf32> -> vector<16x128xf32>
    %5 = vector.broadcast %2 : vector<1x128xf32> to vector<16x128xf32>
    %6 = arith.addf %4, %5 : vector<16x128xf32>
    %7 = arith.negf %6 : vector<16x128xf32>
    %8 = math.exp %7 : vector<16x128xf32>
    %cst_5 = arith.constant 1.000000e+00 : f32
    %9 = vector.broadcast %cst_5 : f32 to vector<16x128xf32>
    %10 = arith.addf %9, %8 : vector<16x128xf32>
    %11 = arith.divf %9, %10 : vector<16x128xf32>
    %c0_6 = arith.constant 0 : index
    %c0_7 = arith.constant 0 : index
    %12 = vector.load %arg4[%c0_6, %c0_7] : memref<128x128xbf16, #tpu.memory_space<vmem>>, vector<128x128xbf16>
    %c0_8 = arith.constant 0 : index
    %c0_9 = arith.constant 0 : index
    %13 = vector.load %arg5[%c0_8, %c0_9] : memref<1x128xf32, #tpu.memory_space<vmem>>, vector<1x128xf32>
    %14 = arith.truncf %11 : vector<16x128xf32> to vector<16x128xbf16>
    %cst_10 = arith.constant dense<0.000000e+00> : vector<16x128xf32>
    %15 = tpu.matmul %14, %12, %cst_10 {dimension_numbers = #tpu.dot_dimension_numbers<[1], [0], [0], [1], [0, 0, 1, 1], [], []>} : vector<16x128xbf16>, vector<128x128xbf16>, vector<16x128xf32> -> vector<16x128xf32>
    %16 = vector.broadcast %13 : vector<1x128xf32> to vector<16x128xf32>
    %17 = arith.addf %15, %16 : vector<16x128xf32>
    %18 = arith.negf %17 : vector<16x128xf32>
    %19 = math.exp %18 : vector<16x128xf32>
    %cst_11 = arith.constant 1.000000e+00 : f32
    %20 = vector.broadcast %cst_11 : f32 to vector<16x128xf32>
    %21 = arith.addf %20, %19 : vector<16x128xf32>
    %22 = arith.divf %20, %21 : vector<16x128xf32>
    %c0_12 = arith.constant 0 : index
    %c0_13 = arith.constant 0 : index
    %23 = vector.load %arg6[%c0_12, %c0_13] : memref<128x128xbf16, #tpu.memory_space<vmem>>, vector<128x128xbf16>
    %c0_14 = arith.constant 0 : index
    %c0_15 = arith.constant 0 : index
    %24 = vector.load %arg7[%c0_14, %c0_15] : memref<1x128xf32, #tpu.memory_space<vmem>>, vector<1x128xf32>
    %25 = arith.truncf %22 : vector<16x128xf32> to vector<16x128xbf16>
    %cst_16 = arith.constant dense<0.000000e+00> : vector<16x128xf32>
    %26 = tpu.matmul %25, %23, %cst_16 {dimension_numbers = #tpu.dot_dimension_numbers<[1], [0], [0], [1], [0, 0, 1, 1], [], []>} : vector<16x128xbf16>, vector<128x128xbf16>, vector<16x128xf32> -> vector<16x128xf32>
    %27 = vector.broadcast %24 : vector<1x128xf32> to vector<16x128xf32>
    %28 = arith.addf %26, %27 : vector<16x128xf32>
    %c0_17 = arith.constant 0 : index
    %c0_18 = arith.constant 0 : index
    %29 = vector.load %arg8[%c0_17, %c0_18] : memref<16x128xf32, #tpu.memory_space<vmem>>, vector<16x128xf32>
    tpu.vector_store %arg8[%c0_17, %c0_18], %28 {strides = array<i32>} : memref<16x128xf32, #tpu.memory_space<vmem>>, vector<16x128xf32>,
    return
  }
  func.func @transform_0(%arg0: i32) -> (i32, i32) {
    %c0_i32 = arith.constant 0 : i32
    %c0_i32_0 = arith.constant 0 : i32
    return %arg0, %c0_i32 : i32, i32
  }
  func.func @transform_1(%arg0: i32) -> (i32, i32) {
    %c0_i32 = arith.constant 0 : i32
    %c0_i32_0 = arith.constant 0 : i32
    %c0_i32_1 = arith.constant 0 : i32
    return %c0_i32, %c0_i32_0 : i32, i32
  }
  func.func @transform_2(%arg0: i32) -> (i32, i32) {
    %c0_i32 = arith.constant 0 : i32
    %c0_i32_0 = arith.constant 0 : i32
    %c0_i32_1 = arith.constant 0 : i32
    return %c0_i32, %c0_i32_0 : i32, i32
  }
  func.func @transform_3(%arg0: i32) -> (i32, i32) {
    %c0_i32 = arith.constant 0 : i32
    %c0_i32_0 = arith.constant 0 : i32
    %c0_i32_1 = arith.constant 0 : i32
    return %c0_i32, %c0_i32_0 : i32, i32
  }
  func.func @transform_4(%arg0: i32) -> (i32, i32) {
    %c0_i32 = arith.constant 0 : i32
    %c0_i32_0 = arith.constant 0 : i32
    %c0_i32_1 = arith.constant 0 : i32
    return %c0_i32, %c0_i32_0 : i32, i32
  }
  func.func @transform_5(%arg0: i32) -> (i32, i32) {
    %c0_i32 = arith.constant 0 : i32
    %c0_i32_0 = arith.constant 0 : i32
    %c0_i32_1 = arith.constant 0 : i32
    return %c0_i32, %c0_i32_0 : i32, i32
  }
  func.func @transform_6(%arg0: i32) -> (i32, i32) {
    %c0_i32 = arith.constant 0 : i32
    %c0_i32_0 = arith.constant 0 : i32
    %c0_i32_1 = arith.constant 0 : i32
    return %c0_i32, %c0_i32_0 : i32, i32
  }
  func.func @transform_7(%arg0: i32) -> (i32, i32) {
    %c0_i32 = arith.constant 0 : i32
    %c0_i32_0 = arith.constant 0 : i32
    return %arg0, %c0_i32 : i32, i32
  }
}

</mosaic_0001>

<llo_original>
// kernel: tpu_custom_call.1
$region0: #{tpu_custom_call.1}
  #allocation0 [shape = 'u32[]', space=smem, size = 0x4, offset = 0x4, fixed_abs, tag = 'smem constant byte address 0x4 - core index']
  #allocation1 [shape = 'u32[144,128]{1,0:T(1,128)}', space=vmem, size = 0x12000, scoped, tag = 'internal scratch']
  %s0 = inlined_call_operand.hbm [shape: f32[16,128], index: 0, kind: input, shape index: {}]
  %s1 = inlined_call_operand.hbm [shape: bf16[128,128], index: 1, kind: input, shape index: {}]
  %s2 = inlined_call_operand.vmem [shape: f32[1,128], index: 2, kind: input, shape index: {}]
  %s3 = inlined_call_operand.hbm [shape: bf16[128,128], index: 3, kind: input, shape index: {}]
  %s4 = inlined_call_operand.vmem [shape: f32[1,128], index: 4, kind: input, shape index: {}]
  %s5 = inlined_call_operand.hbm [shape: bf16[128,128], index: 5, kind: input, shape index: {}]
  %s6 = inlined_call_operand.vmem [shape: f32[1,128], index: 6, kind: input, shape index: {}]
  %s7 = inlined_call_operand.hbm [shape: f32[16,128], index: 7, kind: output, shape index: {}]
  %s8 = sld [smem:[#allocation0]]
  $region54: #{tpu_custom_call.1} parent=0
    _
  %s10 = ssub.s32 1, %s8
  %s11 = scalar_select 0, %s10, %s8
  $region1: #{tpu_custom_call.1} parent=0
    #allocation2 [shape = 'u8[8192]{0}', space=vmem, size = 0x2000, scoped, tag = 'input window, operand 0, single buffered']
    #allocation3 [shape = 's32[1]{0}', space=sflag, size = 0x4, scoped, tag = 'scoped memory for tpu_custom_call.1']
    #allocation4 [shape = 's32[1]{0}', space=sflag, size = 0x4, scoped, tag = 'scoped memory for tpu_custom_call.1']
    #allocation5 [shape = 'u8[32768]{0}', space=vmem, size = 0x8000, scoped, tag = 'input window, operand 1, single buffered']
    #allocation6 [shape = 's32[1]{0}', space=sflag, size = 0x4, scoped, tag = 'scoped memory for tpu_custom_call.1']
    #allocation7 [shape = 'u8[32768]{0}', space=vmem, size = 0x8000, scoped, tag = 'input window, operand 3, single buffered']
    #allocation8 [shape = 'u8[32768]{0}', space=vmem, size = 0x8000, scoped, tag = 'input window, operand 5, single buffered']
    #allocation9 [shape = 's32[1]{0}', space=sflag, size = 0x4, scoped, tag = 'scoped memory for tpu_custom_call.1']
    #allocation10 [shape = 'u8[8192]{0}', space=vmem, size = 0x2000, scoped, tag = 'output window, operand 0, single buffered']
    %12 = vsyncpa [#allocation3], 0
    %13 = vsyncpa [#allocation6], 0
    %14 = vsyncpa [#allocation9], 0
    %15 = vsyncpa [#allocation4], 0
    // Predicated region
    $region2: #{tpu_custom_call.1} parent=1 // pred_check
      _
    $region3: #{tpu_custom_call.1} parent=1 // pred_check_branch
      %17 = sbr.rel (0) target = $region5
    $region4: #{tpu_custom_call.1} parent=1 // pred_region
      %s19 = ssub.s32 256, 256
      %20 = vsyncadd [#allocation3], %s19
      %s21 = sshll.u32 [#allocation2], 4
      %s22 = int_to_ptr.vmem [resolvable:$true] %s21
      %27 = dma.hbm_to_vmem [thread:$0]  %s0, 256, %s22, [#allocation3], 128, 128, 8
    $region5: #{tpu_custom_call.1} parent=1 // pred_fallthru
      _
    // Predicated region
    $region6: #{tpu_custom_call.1} parent=1 // pred_check
      _
    $region7: #{tpu_custom_call.1} parent=1 // pred_check_branch
      %29 = sbr.rel (0) target = $region9
    $region8: #{tpu_custom_call.1} parent=1 // pred_region
      %s31 = ssub.s32 1024, 1024
      %32 = vsyncadd [#allocation6], %s31
      %s33 = sshll.u32 [#allocation5], 4
      %s34 = int_to_ptr.vmem [resolvable:$true] %s33
      %39 = dma.hbm_to_vmem [thread:$0]  %s1, 1024, %s34, [#allocation6], 64, 64, 4
    $region9: #{tpu_custom_call.1} parent=1 // pred_fallthru
      _
    // Predicated region
    $region10: #{tpu_custom_call.1} parent=1 // pred_check
      _
    $region11: #{tpu_custom_call.1} parent=1 // pred_check_branch
      %41 = sbr.rel (0) target = $region13
    $region12: #{tpu_custom_call.1} parent=1 // pred_region
      _
    $region13: #{tpu_custom_call.1} parent=1 // pred_fallthru
      _
    // Predicated region
    $region14: #{tpu_custom_call.1} parent=1 // pred_check
      _
    $region15: #{tpu_custom_call.1} parent=1 // pred_check_branch
      %43 = sbr.rel (0) target = $region17
    $region16: #{tpu_custom_call.1} parent=1 // pred_region
      %s45 = ssub.s32 1024, 1024
      %46 = vsyncadd [#allocation6], %s45
      %s47 = sshll.u32 [#allocation7], 4
      %s48 = int_to_ptr.vmem [resolvable:$true] %s47
      %53 = dma.hbm_to_vmem [thread:$0]  %s3, 1024, %s48, [#allocation6], 64, 64, 4
    $region17: #{tpu_custom_call.1} parent=1 // pred_fallthru
      _
    // Predicated region
    $region18: #{tpu_custom_call.1} parent=1 // pred_check
      _
    $region19: #{tpu_custom_call.1} parent=1 // pred_check_branch
      %55 = sbr.rel (0) target = $region21
    $region20: #{tpu_custom_call.1} parent=1 // pred_region
      _
    $region21: #{tpu_custom_call.1} parent=1 // pred_fallthru
      _
    // Predicated region
    $region22: #{tpu_custom_call.1} parent=1 // pred_check
      _
    $region23: #{tpu_custom_call.1} parent=1 // pred_check_branch
      %57 = sbr.rel (0) target = $region25
    $region24: #{tpu_custom_call.1} parent=1 // pred_region
      %s59 = ssub.s32 1024, 1024
      %60 = vsyncadd [#allocation9], %s59
      %s61 = sshll.u32 [#allocation8], 4
      %s62 = int_to_ptr.vmem [resolvable:$true] %s61
      %67 = dma.hbm_to_vmem [thread:$0]  %s5, 1024, %s62, [#allocation9], 64, 64, 4
    $region25: #{tpu_custom_call.1} parent=1 // pred_fallthru
      _
    // Predicated region
    $region26: #{tpu_custom_call.1} parent=1 // pred_check
      _
    $region27: #{tpu_custom_call.1} parent=1 // pred_check_branch
      %69 = sbr.rel (0) target = $region29
    $region28: #{tpu_custom_call.1} parent=1 // pred_region
      _
    $region29: #{tpu_custom_call.1} parent=1 // pred_fallthru
      _
    // Predicated region
    $region30: #{tpu_custom_call.1} parent=1 // pred_check
      _
    $region31: #{tpu_custom_call.1} parent=1 // pred_check_branch
      %71 = sbr.rel (0) target = $region33
    $region32: #{tpu_custom_call.1} parent=1 // pred_region
      %72 = dma.done [#allocation3], 256
    $region33: #{tpu_custom_call.1} parent=1 // pred_fallthru
      _
    // Predicated region
    $region34: #{tpu_custom_call.1} parent=1 // pred_check
      _
    $region35: #{tpu_custom_call.1} parent=1 // pred_check_branch
      %74 = sbr.rel (0) target = $region37
    $region36: #{tpu_custom_call.1} parent=1 // pred_region
      %75 = dma.done [#allocation6], 1024
    $region37: #{tpu_custom_call.1} parent=1 // pred_fallthru
      _
    // Predicated region
    $region38: #{tpu_custom_call.1} parent=1 // pred_check
      _
    $region39: #{tpu_custom_call.1} parent=1 // pred_check_branch
      %77 = sbr.rel (0) target = $region41
    $region40: #{tpu_custom_call.1} parent=1 // pred_region
      %78 = dma.done [#allocation6], 1024
    $region41: #{tpu_custom_call.1} parent=1 // pred_fallthru
      _
    // Predicated region
    $region42: #{tpu_custom_call.1} parent=1 // pred_check
      _
    $region43: #{tpu_custom_call.1} parent=1 // pred_check_branch
      %80 = sbr.rel (0) target = $region45
    $region44: #{tpu_custom_call.1} parent=1 // pred_region
      %81 = dma.done [#allocation9], 1024
    $region45: #{tpu_custom_call.1} parent=1 // pred_fallthru
      _
    %v83 = vld [vmem:[#allocation2] sm:$0xff]
    %v84 = vld [vmem:[#allocation2 + $0x8] sm:$0xff]
    %v85 = vld [vmem:[#allocation5] sm:$0xf]
    %v86 = vld [vmem:[#allocation5 + $0x4] sm:$0xf]
    %v87 = vld [vmem:[#allocation5 + $0x8] sm:$0xf]
    %v88 = vld [vmem:[#allocation5 + $0xc] sm:$0xf]
    %v89 = vld [vmem:[#allocation5 + $0x10] sm:$0xf]
    %v90 = vld [vmem:[#allocation5 + $0x14] sm:$0xf]
    %v91 = vld [vmem:[#allocation5 + $0x18] sm:$0xf]
    %v92 = vld [vmem:[#allocation5 + $0x1c] sm:$0xf]
    %v93 = vld [vmem:[#allocation5 + $0x20] sm:$0xf]
    %v94 = vld [vmem:[#allocation5 + $0x24] sm:$0xf]
    %v95 = vld [vmem:[#allocation5 + $0x28] sm:$0xf]
    %v96 = vld [vmem:[#allocation5 + $0x2c] sm:$0xf]
    %v97 = vld [vmem:[#allocation5 + $0x30] sm:$0xf]
    %v98 = vld [vmem:[#allocation5 + $0x34] sm:$0xf]
    %v99 = vld [vmem:[#allocation5 + $0x38] sm:$0xf]
    %v100 = vld [vmem:[#allocation5 + $0x3c] sm:$0xf]
    %v101 = vld [vmem:[%s2] sm:$0x1]
    %v102 = vpack.c.bf16 %v84, %v83
    %v104 = vlaneseq
    %v105 = vshrl.u32 %v104, 7
    %v106 = vsub.s32 0, %v105
    %v107 = vrot.slane %v101, %v106
    %v125 = vunpack.c.l.b16 %v85
    %v126 = vunpack.c.l.b16 %v86
    %v127 = vunpack.c.l.b16 %v87
    %v128 = vunpack.c.l.b16 %v88
    %v129 = vunpack.c.l.b16 %v89
    %v130 = vunpack.c.l.b16 %v90
    %v131 = vunpack.c.l.b16 %v91
    %v132 = vunpack.c.l.b16 %v92
    %v133 = vunpack.c.l.b16 %v93
    %v134 = vunpack.c.l.b16 %v94
    %v135 = vunpack.c.l.b16 %v95
    %v136 = vunpack.c.l.b16 %v96
    %v137 = vunpack.c.l.b16 %v97
    %v138 = vunpack.c.l.b16 %v98
    %v139 = vunpack.c.l.b16 %v99
    %v140 = vunpack.c.l.b16 %v100
    %v141 = vpack.c.b16 %v126, %v125
    %v142 = vpack.c.b16 %v128, %v127
    %v143 = vpack.c.b16 %v130, %v129
    %v144 = vpack.c.b16 %v132, %v131
    %v145 = vpack.c.b16 %v134, %v133
    %v146 = vpack.c.b16 %v136, %v135
    %v147 = vpack.c.b16 %v138, %v137
    %v148 = vpack.c.b16 %v140, %v139
    %157 = vmatprep.subr.bf16.mxu0 0
    %158 = vmatpush1.bf16.msra.mxu0 %v141
    %159 = vmatprep.subr.bf16.mxu0 0
    %160 = vmatpush1.bf16.msra.mxu0 %v142
    %161 = vmatprep.subr.bf16.mxu0 0
    %162 = vmatpush1.bf16.msra.mxu0 %v143
    %163 = vmatprep.subr.bf16.mxu0 0
    %164 = vmatpush1.bf16.msra.mxu0 %v144
    %165 = vmatprep.subr.bf16.mxu0 0
    %166 = vmatpush1.bf16.msra.mxu0 %v145
    %167 = vmatprep.subr.bf16.mxu0 0
    %168 = vmatpush1.bf16.msra.mxu0 %v146
    %169 = vmatprep.subr.bf16.mxu0 0
    %170 = vmatpush1.bf16.msra.mxu0 %v147
    %171 = vmatprep.subr.bf16.mxu0 0
    %172 = vmatpush1.bf16.msra.mxu0 %v148
    %173 = vmatprep.subr.bf16.mxu0 0
    %174 = vmatpush1.bf16.msra.mxu0 0
    %175 = vmatprep.subr.bf16.mxu0 0
    %176 = vmatpush1.bf16.msra.mxu0 0
    %177 = vmatprep.subr.bf16.mxu0 0
    %178 = vmatpush1.bf16.msra.mxu0 0
    %179 = vmatprep.subr.bf16.mxu0 0
    %180 = vmatpush1.bf16.msra.mxu0 0
    %181 = vmatprep.subr.bf16.mxu0 0
    %182 = vmatpush1.bf16.msra.mxu0 0
    %183 = vmatprep.subr.bf16.mxu0 0
    %184 = vmatpush1.bf16.msra.mxu0 0
    %185 = vmatprep.subr.bf16.mxu0 0
    %186 = vmatpush1.bf16.msra.mxu0 0
    %187 = vmatprep.subr.bf16.mxu0 0
    %188 = vmatpush1.bf16.msra.mxu0 0
    %189 = vmatprep.mubr.bf16.mxu0 0
    %190 = vmatmul.mubr.bf16.gmra.mrb[0].mxu0 %v102
    %v191 = vpop.f32.mrb[0].mxu0
    %v192 = vadd.f32 %v107, %v191
    %v193 = vpop.f32.mrb[0].mxu0
    %v194 = vpop.f32.mrb[0].mxu0
    %v195 = vadd.f32 %v107, %v194
    %v196 = vpop.f32.mrb[0].mxu0
    %197 = vdwg.mxu0
    %v198 = vxor.u32 %v192, 2147483648
    %v199 = vxor.u32 %v195, 2147483648
    %v200 = vmul.f32 %v198, 1.442695
    %v201 = vpow.pop %v200
    %v202 = vmul.f32 %v199, 1.442695
    %v203 = vpow.pop %v202
    %v204 = vadd.f32 %v201, 1.0
    %v205 = vadd.f32 %v203, 1.0
    %v206 = vrcp.pop %v204
    %v207 = vmul.f32 1.0, %v206
    %v208 = vrcp.pop %v205
    %v209 = vmul.f32 1.0, %v208
    %v210 = vld [vmem:[#allocation7] sm:$0xf]
    %v211 = vld [vmem:[#allocation7 + $0x4] sm:$0xf]
    %v212 = vld [vmem:[#allocation7 + $0x8] sm:$0xf]
    %v213 = vld [vmem:[#allocation7 + $0xc] sm:$0xf]
    %v214 = vld [vmem:[#allocation7 + $0x10] sm:$0xf]
    %v215 = vld [vmem:[#allocation7 + $0x14] sm:$0xf]
    %v216 = vld [vmem:[#allocation7 + $0x18] sm:$0xf]
    %v217 = vld [vmem:[#allocation7 + $0x1c] sm:$0xf]
    %v218 = vld [vmem:[#allocation7 + $0x20] sm:$0xf]
    %v219 = vld [vmem:[#allocation7 + $0x24] sm:$0xf]
    %v220 = vld [vmem:[#allocation7 + $0x28] sm:$0xf]
    %v221 = vld [vmem:[#allocation7 + $0x2c] sm:$0xf]
    %v222 = vld [vmem:[#allocation7 + $0x30] sm:$0xf]
    %v223 = vld [vmem:[#allocation7 + $0x34] sm:$0xf]
    %v224 = vld [vmem:[#allocation7 + $0x38] sm:$0xf]
    %v225 = vld [vmem:[#allocation7 + $0x3c] sm:$0xf]
    %v226 = vld [vmem:[%s4] sm:$0x1]
    %v227 = vpack.c.bf16 %v209, %v207
    %v229 = vlaneseq
    %v230 = vshrl.u32 %v229, 7
    %v231 = vsub.s32 0, %v230
    %v232 = vrot.slane %v226, %v231
    %v250 = vunpack.c.l.b16 %v210
    %v251 = vunpack.c.l.b16 %v211
    %v252 = vunpack.c.l.b16 %v212
    %v253 = vunpack.c.l.b16 %v213
    %v254 = vunpack.c.l.b16 %v214
    %v255 = vunpack.c.l.b16 %v215
    %v256 = vunpack.c.l.b16 %v216
    %v257 = vunpack.c.l.b16 %v217
    %v258 = vunpack.c.l.b16 %v218
    %v259 = vunpack.c.l.b16 %v219
    %v260 = vunpack.c.l.b16 %v220
    %v261 = vunpack.c.l.b16 %v221
    %v262 = vunpack.c.l.b16 %v222
    %v263 = vunpack.c.l.b16 %v223
    %v264 = vunpack.c.l.b16 %v224
    %v265 = vunpack.c.l.b16 %v225
    %v266 = vpack.c.b16 %v251, %v250
    %v267 = vpack.c.b16 %v253, %v252
    %v268 = vpack.c.b16 %v255, %v254
    %v269 = vpack.c.b16 %v257, %v256
    %v270 = vpack.c.b16 %v259, %v258
    %v271 = vpack.c.b16 %v261, %v260
    %v272 = vpack.c.b16 %v263, %v262
    %v273 = vpack.c.b16 %v265, %v264
    %282 = vmatprep.subr.bf16.mxu0 0
    %283 = vmatpush1.bf16.msra.mxu0 %v266
    %284 = vmatprep.subr.bf16.mxu0 0
    %285 = vmatpush1.bf16.msra.mxu0 %v267
    %286 = vmatprep.subr.bf16.mxu0 0
    %287 = vmatpush1.bf16.msra.mxu0 %v268
    %288 = vmatprep.subr.bf16.mxu0 0
    %289 = vmatpush1.bf16.msra.mxu0 %v269
    %290 = vmatprep.subr.bf16.mxu0 0
    %291 = vmatpush1.bf16.msra.mxu0 %v270
    %292 = vmatprep.subr.bf16.mxu0 0
    %293 = vmatpush1.bf16.msra.mxu0 %v271
    %294 = vmatprep.subr.bf16.mxu0 0
    %295 = vmatpush1.bf16.msra.mxu0 %v272
    %296 = vmatprep.subr.bf16.mxu0 0
    %297 = vmatpush1.bf16.msra.mxu0 %v273
    %298 = vmatprep.subr.bf16.mxu0 0
    %299 = vmatpush1.bf16.msra.mxu0 0
    %300 = vmatprep.subr.bf16.mxu0 0
    %301 = vmatpush1.bf16.msra.mxu0 0
    %302 = vmatprep.subr.bf16.mxu0 0
    %303 = vmatpush1.bf16.msra.mxu0 0
    %304 = vmatprep.subr.bf16.mxu0 0
    %305 = vmatpush1.bf16.msra.mxu0 0
    %306 = vmatprep.subr.bf16.mxu0 0
    %307 = vmatpush1.bf16.msra.mxu0 0
    %308 = vmatprep.subr.bf16.mxu0 0
    %309 = vmatpush1.bf16.msra.mxu0 0
    %310 = vmatprep.subr.bf16.mxu0 0
    %311 = vmatpush1.bf16.msra.mxu0 0
    %312 = vmatprep.subr.bf16.mxu0 0
    %313 = vmatpush1.bf16.msra.mxu0 0
    %314 = vmatprep.mubr.bf16.mxu0 0
    %315 = vmatmul.mubr.bf16.gmra.mrb[0].mxu0 %v227
    %v316 = vpop.f32.mrb[0].mxu0
    %v317 = vadd.f32 %v232, %v316
    %v318 = vpop.f32.mrb[0].mxu0
    %v319 = vpop.f32.mrb[0].mxu0
    %v320 = vadd.f32 %v232, %v319
    %v321 = vpop.f32.mrb[0].mxu0
    %322 = vdwg.mxu0
    %v323 = vxor.u32 %v317, 2147483648
    %v324 = vxor.u32 %v320, 2147483648
    %v325 = vmul.f32 %v323, 1.442695
    %v326 = vpow.pop %v325
    %v327 = vmul.f32 %v324, 1.442695
    %v328 = vpow.pop %v327
    %v329 = vadd.f32 %v326, 1.0
    %v330 = vadd.f32 %v328, 1.0
    %v331 = vrcp.pop %v329
    %v332 = vmul.f32 1.0, %v331
    %v333 = vrcp.pop %v330
    %v334 = vmul.f32 1.0, %v333
    %v335 = vld [vmem:[#allocation8] sm:$0xf]
    %v336 = vld [vmem:[#allocation8 + $0x4] sm:$0xf]
    %v337 = vld [vmem:[#allocation8 + $0x8] sm:$0xf]
    %v338 = vld [vmem:[#allocation8 + $0xc] sm:$0xf]
    %v339 = vld [vmem:[#allocation8 + $0x10] sm:$0xf]
    %v340 = vld [vmem:[#allocation8 + $0x14] sm:$0xf]
    %v341 = vld [vmem:[#allocation8 + $0x18] sm:$0xf]
    %v342 = vld [vmem:[#allocation8 + $0x1c] sm:$0xf]
    %v343 = vld [vmem:[#allocation8 + $0x20] sm:$0xf]
    %v344 = vld [vmem:[#allocation8 + $0x24] sm:$0xf]
    %v345 = vld [vmem:[#allocation8 + $0x28] sm:$0xf]
    %v346 = vld [vmem:[#allocation8 + $0x2c] sm:$0xf]
    %v347 = vld [vmem:[#allocation8 + $0x30] sm:$0xf]
    %v348 = vld [vmem:[#allocation8 + $0x34] sm:$0xf]
    %v349 = vld [vmem:[#allocation8 + $0x38] sm:$0xf]
    %v350 = vld [vmem:[#allocation8 + $0x3c] sm:$0xf]
    %v351 = vld [vmem:[%s6] sm:$0x1]
    %v352 = vpack.c.bf16 %v334, %v332
    %v354 = vlaneseq
    %v355 = vshrl.u32 %v354, 7
    %v356 = vsub.s32 0, %v355
    %v357 = vrot.slane %v351, %v356
    %v375 = vunpack.c.l.b16 %v335
    %v376 = vunpack.c.l.b16 %v336
    %v377 = vunpack.c.l.b16 %v337
    %v378 = vunpack.c.l.b16 %v338
    %v379 = vunpack.c.l.b16 %v339
    %v380 = vunpack.c.l.b16 %v340
    %v381 = vunpack.c.l.b16 %v341
    %v382 = vunpack.c.l.b16 %v342
    %v383 = vunpack.c.l.b16 %v343
    %v384 = vunpack.c.l.b16 %v344
    %v385 = vunpack.c.l.b16 %v345
    %v386 = vunpack.c.l.b16 %v346
    %v387 = vunpack.c.l.b16 %v347
    %v388 = vunpack.c.l.b16 %v348
    %v389 = vunpack.c.l.b16 %v349
    %v390 = vunpack.c.l.b16 %v350
    %v391 = vpack.c.b16 %v376, %v375
    %v392 = vpack.c.b16 %v378, %v377
    %v393 = vpack.c.b16 %v380, %v379
    %v394 = vpack.c.b16 %v382, %v381
    %v395 = vpack.c.b16 %v384, %v383
    %v396 = vpack.c.b16 %v386, %v385
    %v397 = vpack.c.b16 %v388, %v387
    %v398 = vpack.c.b16 %v390, %v389
    %407 = vmatprep.subr.bf16.mxu0 0
    %408 = vmatpush1.bf16.msra.mxu0 %v391
    %409 = vmatprep.subr.bf16.mxu0 0
    %410 = vmatpush1.bf16.msra.mxu0 %v392
    %411 = vmatprep.subr.bf16.mxu0 0
    %412 = vmatpush1.bf16.msra.mxu0 %v393
    %413 = vmatprep.subr.bf16.mxu0 0
    %414 = vmatpush1.bf16.msra.mxu0 %v394
    %415 = vmatprep.subr.bf16.mxu0 0
    %416 = vmatpush1.bf16.msra.mxu0 %v395
    %417 = vmatprep.subr.bf16.mxu0 0
    %418 = vmatpush1.bf16.msra.mxu0 %v396
    %419 = vmatprep.subr.bf16.mxu0 0
    %420 = vmatpush1.bf16.msra.mxu0 %v397
    %421 = vmatprep.subr.bf16.mxu0 0
    %422 = vmatpush1.bf16.msra.mxu0 %v398
    %423 = vmatprep.subr.bf16.mxu0 0
    %424 = vmatpush1.bf16.msra.mxu0 0
    %425 = vmatprep.subr.bf16.mxu0 0
    %426 = vmatpush1.bf16.msra.mxu0 0
    %427 = vmatprep.subr.bf16.mxu0 0
    %428 = vmatpush1.bf16.msra.mxu0 0
    %429 = vmatprep.subr.bf16.mxu0 0
    %430 = vmatpush1.bf16.msra.mxu0 0
    %431 = vmatprep.subr.bf16.mxu0 0
    %432 = vmatpush1.bf16.msra.mxu0 0
    %433 = vmatprep.subr.bf16.mxu0 0
    %434 = vmatpush1.bf16.msra.mxu0 0
    %435 = vmatprep.subr.bf16.mxu0 0
    %436 = vmatpush1.bf16.msra.mxu0 0
    %437 = vmatprep.subr.bf16.mxu0 0
    %438 = vmatpush1.bf16.msra.mxu0 0
    %439 = vmatprep.mubr.bf16.mxu0 0
    %440 = vmatmul.mubr.bf16.gmra.mrb[0].mxu0 %v352
    %v441 = vpop.f32.mrb[0].mxu0
    %v442 = vadd.f32 %v357, %v441
    %v443 = vpop.f32.mrb[0].mxu0
    %v444 = vpop.f32.mrb[0].mxu0
    %v445 = vadd.f32 %v357, %v444
    %v446 = vpop.f32.mrb[0].mxu0
    %447 = vdwg.mxu0
    %448 = vst [vmem:[#allocation10] sm:$0xff] %v442
    %449 = vst [vmem:[#allocation10 + $0x8] sm:$0xff] %v445
    // Predicated region
    $region46: #{tpu_custom_call.1} parent=1 // pred_check
      _
    $region47: #{tpu_custom_call.1} parent=1 // pred_check_branch
      %451 = sbr.rel (0) target = $region49
    $region48: #{tpu_custom_call.1} parent=1 // pred_region
      %s453 = ssub.s32 256, 256
      %454 = vsyncadd [#allocation4], %s453
      %s455 = sshll.u32 [#allocation10], 4
      %s456 = int_to_ptr.vmem [resolvable:$true] %s455
      %461 = dma.vmem_to_hbm [thread:$0]  %s456, 256, %s7, [#allocation4], 128, 128, 8
    $region49: #{tpu_custom_call.1} parent=1 // pred_fallthru
      _
    // Predicated region
    $region50: #{tpu_custom_call.1} parent=1 // pred_check
      _
    $region51: #{tpu_custom_call.1} parent=1 // pred_check_branch
      %463 = sbr.rel (0) target = $region53
    $region52: #{tpu_custom_call.1} parent=1 // pred_region
      %464 = dma.done [#allocation4], 256
    $region53: #{tpu_custom_call.1} parent=1 // pred_fallthru
      _
    %465 = vsyncpa [#allocation3], 1
    %466 = vsyncpa [#allocation6], 1
    %467 = vsyncpa [#allocation9], 1
    %468 = vsyncpa [#allocation4], 1

</llo_original>
